<compile_context>
chip_gen: v7x
topology: tpu7x:2x2x1
jax: 0.10.0
libtpu: 0.0.40
codegen_flags: <defaults>
</compile_context>

<pallas_src>
import jax
import jax.numpy as jnp
from jax.experimental import pallas as pl
from jax.experimental.pallas import tpu as pltpu


def _round_up(x: int, m: int) -> int:
    return ((x + m - 1) // m) * m


def mlp_kernel(x_ref, w1_ref, b1_ref, w2_ref, b2_ref, o_ref):
    # First linear on the MXU: (tm, dim_in) @ (dim_in, hid_p) with f32 accumulation.
    h = jnp.dot(x_ref[...], w1_ref[...], preferred_element_type=jnp.float32)
    # Dropout (eval mode) is identity; bias + ReLU on the VPU (padded hidden cols stay 0).
    h = jnp.maximum(h + b1_ref[...], 0.0)
    # Second linear: (tm, hid_p) @ (hid_p, out_p).
    y = jnp.dot(h, w2_ref[...], preferred_element_type=jnp.float32)
    o_ref[...] = (y + b2_ref[...]).astype(o_ref.dtype)


def _vmem_capacity_bytes() -> int:
    # Generation-aware VMEM capacity (128 MiB on v5e/v6e, 64 MiB per TC on v7x).
    try:
        return int(pltpu.get_tpu_info().vmem_capacity_bytes)
    except Exception:
        return 64 << 20  # conservative fallback


def mlp_forward(x_nchw, w1, b1, w2, b2, *, tm_max: int = 512):
    """x_nchw: (B, C, H, W) f32; w1: (dim_in, dim_hidden); b1: (dim_hidden,);
       w2: (dim_hidden, dim_out); b2: (dim_out,).  Returns (B, dim_out) f32."""
    B = x_nchw.shape[0]
    dim_in = x_nchw.shape[1] * x_nchw.shape[-2] * x_nchw.shape[-1]
    dim_hidden = w1.shape[1]
    dim_out = w2.shape[1]

    # ---- Flatten like x.view(-1, C*H*W). No HBM padding / copy of the streamed operand. ----
    x2d = x_nchw.reshape(B, dim_in)

    # ---- Lane padding only where needed (weights/biases are small, padded once, zeros). ----
    hid_p = _round_up(dim_hidden, 128)
    out_p = _round_up(dim_out, 128)
    w1_p = jnp.zeros((dim_in, hid_p), w1.dtype).at[:, :dim_hidden].set(w1)
    b1_p = jnp.zeros((1, hid_p), b1.dtype).at[0, :dim_hidden].set(b1)
    w2_p = jnp.zeros((hid_p, out_p), w2.dtype).at[:dim_hidden, :dim_out].set(w2)
    b2_p = jnp.zeros((1, out_p), b2.dtype).at[0, :dim_out].set(b2)

    # ---- VMEM budget (counts the double-buffered resident weights) and tm selection. ----
    bpe = 4  # f32
    resident_bytes = 2 * bpe * (dim_in * hid_p + hid_p * out_p + hid_p + out_p)
    per_row_bytes = bpe * (2 * dim_in + hid_p + 2 * out_p)  # 2x streamed x + h + 2x out, per row

    vmem_cap = _vmem_capacity_bytes()
    budget = int(0.8 * vmem_cap)

    tm_cap = min(tm_max, _round_up(B, 8))
    if B >= 16:
        # Keep >= 2 batch blocks so the "parallel" grid axis can feed both v7x TensorCores.
        tm_cap = min(tm_cap, _round_up(pl.cdiv(B, 2), 8))
    headroom = budget - resident_bytes - (2 << 20)
    tm_fit = max(8, (headroom // per_row_bytes) // 8 * 8) if headroom > per_row_bytes * 8 else 8
    tm = int(max(8, min(tm_cap, tm_fit)))
    n_blocks = pl.cdiv(B, tm)

    tile_bytes = resident_bytes + tm * per_row_bytes
    vmem_limit = int(min(budget, max(tile_bytes + (2 << 20), 16 << 20)))

    cost = pl.CostEstimate(
        flops=2 * B * dim_in * hid_p + 2 * B * hid_p * out_p,
        transcendentals=0,
        bytes_accessed=bpe * (B * dim_in + dim_in * hid_p + hid_p * out_p
                              + hid_p + out_p + B * out_p),
    )

    out = pl.pallas_call(
        mlp_kernel,
        out_shape=jax.ShapeDtypeStruct((B, out_p), x2d.dtype),
        grid=(n_blocks,),
        in_specs=[
            pl.BlockSpec((tm, dim_in), lambda i: (i, 0)),     # x: streamed per batch tile
            pl.BlockSpec((dim_in, hid_p), lambda i: (0, 0)),  # w1: VMEM-resident
            pl.BlockSpec((1, hid_p), lambda i: (0, 0)),       # b1: VMEM-resident
            pl.BlockSpec((hid_p, out_p), lambda i: (0, 0)),   # w2: VMEM-resident
            pl.BlockSpec((1, out_p), lambda i: (0, 0)),       # b2: VMEM-resident
        ],
        out_specs=pl.BlockSpec((tm, out_p), lambda i: (i, 0)),  # partial last block: masked write
        compiler_params=pltpu.CompilerParams(
            dimension_semantics=("parallel",),   # shard batch tiles across TCs (v7x megacore)
            vmem_limit_bytes=vmem_limit,
        ),
        cost_estimate=cost,
    )(x2d, w1_p, b1_p, w2_p, b2_p)

    # Column slice back to the logical width only when padding was added (rows already exact).
    if out_p != dim_out:
        out = out[:, :dim_out]
    return out


def init_linear_params(key, fan_in, fan_out):
    """Mimic PyTorch nn.Linear default init: U(-1/sqrt(fan_in), 1/sqrt(fan_in)).
       Weight returned already transposed to (fan_in, fan_out) so the kernel does x @ W."""
    kw, kb = jax.random.split(key)
    bound = 1.0 / jnp.sqrt(jnp.float32(fan_in))
    w = jax.random.uniform(kw, (fan_in, fan_out), jnp.float32, -bound, bound)
    b = jax.random.uniform(kb, (fan_out,), jnp.float32, -bound, bound)
    return w, b


if __name__ == "__main__":
    # Small shapes consistent with the forward: NCHW input -> dim_in = C*H*W.
    B, C, H, W = 2, 4, 16, 16
    dim_in = C * H * W          # 1024
    dim_hidden = 64
    dim_out = 16

    key = jax.random.PRNGKey(0)
    kx, k1, k2 = jax.random.split(key, 3)

    x = jax.random.normal(kx, (B, C, H, W), jnp.float32)
    w1, b1 = init_linear_params(k1, dim_in, dim_hidden)
    w2, b2 = init_linear_params(k2, dim_hidden, dim_out)

    y = mlp_forward(x, w1, b1, w2, b2)
    y = jax.block_until_ready(y)

    # Pure-JAX reference (same semantics: eval-mode dropout is identity).
    x2d = x.reshape(B, dim_in)
    ref = jnp.maximum(x2d @ w1 + b1, 0.0) @ w2 + b2
    assert y.shape == (B, dim_out)
    assert jnp.allclose(y, ref, atol=1e-4, rtol=1e-4)

    print("KERNEL_OK")
</pallas_src>

<mosaic_0001>
module attributes {stable_mosaic.version = 11 : i64} {
  func.func @mlp_kernel(%arg0: i32, %arg1: memref<8x1024xf32, #tpu.memory_space<vmem>>, %arg2: memref<1024x128xf32, #tpu.memory_space<vmem>>, %arg3: memref<1x128xf32, #tpu.memory_space<vmem>>, %arg4: memref<128x128xf32, #tpu.memory_space<vmem>>, %arg5: memref<1x128xf32, #tpu.memory_space<vmem>>, %arg6: memref<8x128xf32, #tpu.memory_space<vmem>>) attributes {dimension_semantics = [#tpu.dimension_semantics<parallel>], iteration_bounds = array<i64: 1>, scalar_prefetch = 0 : i64, scratch_operands = 0 : i64, tpu.core_type = #tpu.core_type<tc>, window_params = [{transform_indices = @transform_0, window_bounds = array<i64: 8, 1024>}, {pipeline_mode = #tpu.pipeline_mode<synchronous>, transform_indices = @transform_1, window_bounds = array<i64: 1024, 128>}, {pipeline_mode = #tpu.pipeline_mode<synchronous>, transform_indices = @transform_2, window_bounds = array<i64: 1, 128>}, {pipeline_mode = #tpu.pipeline_mode<synchronous>, transform_indices = @transform_3, window_bounds = array<i64: 128, 128>}, {pipeline_mode = #tpu.pipeline_mode<synchronous>, transform_indices = @transform_4, window_bounds = array<i64: 1, 128>}, {transform_indices = @transform_5, window_bounds = array<i64: 8, 128>}]} {
    %c0 = arith.constant 0 : index
    %c0_0 = arith.constant 0 : index
    %0 = vector.load %arg1[%c0, %c0_0] : memref<8x1024xf32, #tpu.memory_space<vmem>>, vector<8x1024xf32>
    %c0_1 = arith.constant 0 : index
    %c0_2 = arith.constant 0 : index
    %1 = vector.load %arg2[%c0_1, %c0_2] : memref<1024x128xf32, #tpu.memory_space<vmem>>, vector<1024x128xf32>
    %cst = arith.constant dense<0.000000e+00> : vector<8x128xf32>
    %2 = tpu.matmul %0, %1, %cst {dimension_numbers = #tpu.dot_dimension_numbers<[1], [0], [0], [1], [0, 0, 1, 1], [], []>} : vector<8x1024xf32>, vector<1024x128xf32>, vector<8x128xf32> -> vector<8x128xf32>
    %c0_3 = arith.constant 0 : index
    %c0_4 = arith.constant 0 : index
    %3 = vector.load %arg3[%c0_3, %c0_4] : memref<1x128xf32, #tpu.memory_space<vmem>>, vector<1x128xf32>
    %4 = vector.broadcast %3 : vector<1x128xf32> to vector<8x128xf32>
    %5 = arith.addf %2, %4 : vector<8x128xf32>
    %cst_5 = arith.constant 0.000000e+00 : f32
    %6 = vector.broadcast %cst_5 : f32 to vector<8x128xf32>
    %7 = arith.maximumf %5, %6 : vector<8x128xf32>
    %c0_6 = arith.constant 0 : index
    %c0_7 = arith.constant 0 : index
    %8 = vector.load %arg4[%c0_6, %c0_7] : memref<128x128xf32, #tpu.memory_space<vmem>>, vector<128x128xf32>
    %cst_8 = arith.constant dense<0.000000e+00> : vector<8x128xf32>
    %9 = tpu.matmul %7, %8, %cst_8 {dimension_numbers = #tpu.dot_dimension_numbers<[1], [0], [0], [1], [0, 0, 1, 1], [], []>} : vector<8x128xf32>, vector<128x128xf32>, vector<8x128xf32> -> vector<8x128xf32>
    %c0_9 = arith.constant 0 : index
    %c0_10 = arith.constant 0 : index
    %10 = vector.load %arg5[%c0_9, %c0_10] : memref<1x128xf32, #tpu.memory_space<vmem>>, vector<1x128xf32>
    %11 = vector.broadcast %10 : vector<1x128xf32> to vector<8x128xf32>
    %12 = arith.addf %9, %11 : vector<8x128xf32>
    %c0_11 = arith.constant 0 : index
    %c0_12 = arith.constant 0 : index
    %13 = vector.load %arg6[%c0_11, %c0_12] : memref<8x128xf32, #tpu.memory_space<vmem>>, vector<8x128xf32>
    tpu.vector_store %arg6[%c0_11, %c0_12], %12 {strides = array<i32>} : memref<8x128xf32, #tpu.memory_space<vmem>>, vector<8x128xf32>,
    return
  }
  func.func @transform_0(%arg0: i32) -> (i32, i32) {
    %c0_i32 = arith.constant 0 : i32
    %c0_i32_0 = arith.constant 0 : i32
    return %arg0, %c0_i32 : i32, i32
  }
  func.func @transform_1(%arg0: i32) -> (i32, i32) {
    %c0_i32 = arith.constant 0 : i32
    %c0_i32_0 = arith.constant 0 : i32
    %c0_i32_1 = arith.constant 0 : i32
    return %c0_i32, %c0_i32_0 : i32, i32
  }
  func.func @transform_2(%arg0: i32) -> (i32, i32) {
    %c0_i32 = arith.constant 0 : i32
    %c0_i32_0 = arith.constant 0 : i32
    %c0_i32_1 = arith.constant 0 : i32
    return %c0_i32, %c0_i32_0 : i32, i32
  }
  func.func @transform_3(%arg0: i32) -> (i32, i32) {
    %c0_i32 = arith.constant 0 : i32
    %c0_i32_0 = arith.constant 0 : i32
    %c0_i32_1 = arith.constant 0 : i32
    return %c0_i32, %c0_i32_0 : i32, i32
  }
  func.func @transform_4(%arg0: i32) -> (i32, i32) {
    %c0_i32 = arith.constant 0 : i32
    %c0_i32_0 = arith.constant 0 : i32
    %c0_i32_1 = arith.constant 0 : i32
    return %c0_i32, %c0_i32_0 : i32, i32
  }
  func.func @transform_5(%arg0: i32) -> (i32, i32) {
    %c0_i32 = arith.constant 0 : i32
    %c0_i32_0 = arith.constant 0 : i32
    return %arg0, %c0_i32 : i32, i32
  }
}

</mosaic_0001>

<llo_original>
// kernel: tpu_custom_call.1
$region0: #{tpu_custom_call.1}
  #allocation0 [shape = 'u32[]', space=smem, size = 0x4, offset = 0x4, fixed_abs, tag = 'smem constant byte address 0x4 - core index']
  #allocation1 [shape = 'u32[144,128]{1,0:T(1,128)}', space=vmem, size = 0x12000, scoped, tag = 'internal scratch']
  %s0 = inlined_call_operand.hbm [shape: f32[2,1024], index: 0, kind: input, shape index: {}]
  %s1 = inlined_call_operand.hbm [shape: f32[1024,128], index: 1, kind: input, shape index: {}]
  %s2 = inlined_call_operand.vmem [shape: f32[1,128], index: 2, kind: input, shape index: {}]
  %s3 = inlined_call_operand.hbm [shape: f32[128,128], index: 3, kind: input, shape index: {}]
  %s4 = inlined_call_operand.vmem [shape: f32[1,128], index: 4, kind: input, shape index: {}]
  %s5 = inlined_call_operand.hbm [shape: f32[2,128], index: 5, kind: output, shape index: {}]
  %s6 = sld [smem:[#allocation0]]
  $region42: #{tpu_custom_call.1} parent=0
    _
  %s8 = ssub.s32 1, %s6
  %s9 = scalar_select 0, %s8, %s6
  $region1: #{tpu_custom_call.1} parent=0
    #allocation2 [shape = 'u8[32768]{0}', space=vmem, size = 0x8000, scoped, tag = 'input window, operand 0, single buffered']
    #allocation3 [shape = 's32[1]{0}', space=sflag, size = 0x4, scoped, tag = 'scoped memory for tpu_custom_call.1']
    #allocation4 [shape = 's32[1]{0}', space=sflag, size = 0x4, scoped, tag = 'scoped memory for tpu_custom_call.1']
    #allocation5 [shape = 'u8[524288]{0}', space=vmem, size = 0x80000, scoped, tag = 'input window, operand 1, single buffered']
    #allocation6 [shape = 's32[1]{0}', space=sflag, size = 0x4, scoped, tag = 'scoped memory for tpu_custom_call.1']
    #allocation7 [shape = 'u8[65536]{0}', space=vmem, size = 0x10000, scoped, tag = 'input window, operand 3, single buffered']
    #allocation8 [shape = 'u8[4096]{0}', space=vmem, size = 0x1000, scoped, tag = 'output window, operand 0, single buffered']
    %10 = vsyncpa [#allocation3], 0
    %11 = vsyncpa [#allocation6], 0
    %12 = vsyncpa [#allocation4], 0
    // Predicated region
    $region2: #{tpu_custom_call.1} parent=1 // pred_check
      _
    $region3: #{tpu_custom_call.1} parent=1 // pred_check_branch
      %14 = sbr.rel (0) target = $region5
    $region4: #{tpu_custom_call.1} parent=1 // pred_region
      %s16 = ssub.s32 1024, 256
      %17 = vsyncadd [#allocation3], %s16
      %s18 = sshll.u32 [#allocation2], 4
      %s19 = int_to_ptr.vmem [resolvable:$true] %s18
      %24 = dma.hbm_to_vmem [thread:$0]  %s0, 256, %s19, [#allocation3], 256, 256, 16
    $region5: #{tpu_custom_call.1} parent=1 // pred_fallthru
      _
    // Predicated region
    $region6: #{tpu_custom_call.1} parent=1 // pred_check
      _
    $region7: #{tpu_custom_call.1} parent=1 // pred_check_branch
      %26 = sbr.rel (0) target = $region9
    $region8: #{tpu_custom_call.1} parent=1 // pred_region
      %s28 = ssub.s32 16384, 16384
      %29 = vsyncadd [#allocation6], %s28
      %s30 = sshll.u32 [#allocation5], 4
      %s31 = int_to_ptr.vmem [resolvable:$true] %s30
      %36 = dma.hbm_to_vmem [thread:$0]  %s1, 16384, %s31, [#allocation6], 128, 128, 8
    $region9: #{tpu_custom_call.1} parent=1 // pred_fallthru
      _
    // Predicated region
    $region10: #{tpu_custom_call.1} parent=1 // pred_check
      _
    $region11: #{tpu_custom_call.1} parent=1 // pred_check_branch
      %38 = sbr.rel (0) target = $region13
    $region12: #{tpu_custom_call.1} parent=1 // pred_region
      _
    $region13: #{tpu_custom_call.1} parent=1 // pred_fallthru
      _
    // Predicated region
    $region14: #{tpu_custom_call.1} parent=1 // pred_check
      _
    $region15: #{tpu_custom_call.1} parent=1 // pred_check_branch
      %40 = sbr.rel (0) target = $region17
    $region16: #{tpu_custom_call.1} parent=1 // pred_region
      %s42 = ssub.s32 2048, 2048
      %43 = vsyncadd [#allocation6], %s42
      %s44 = sshll.u32 [#allocation7], 4
      %s45 = int_to_ptr.vmem [resolvable:$true] %s44
      %50 = dma.hbm_to_vmem [thread:$0]  %s3, 2048, %s45, [#allocation6], 128, 128, 8
    $region17: #{tpu_custom_call.1} parent=1 // pred_fallthru
      _
    // Predicated region
    $region18: #{tpu_custom_call.1} parent=1 // pred_check
      _
    $region19: #{tpu_custom_call.1} parent=1 // pred_check_branch
      %52 = sbr.rel (0) target = $region21
    $region20: #{tpu_custom_call.1} parent=1 // pred_region
      _
    $region21: #{tpu_custom_call.1} parent=1 // pred_fallthru
      _
    // Predicated region
    $region22: #{tpu_custom_call.1} parent=1 // pred_check
      _
    $region23: #{tpu_custom_call.1} parent=1 // pred_check_branch
      %54 = sbr.rel (0) target = $region25
    $region24: #{tpu_custom_call.1} parent=1 // pred_region
      %55 = dma.done [#allocation3], 1024
    $region25: #{tpu_custom_call.1} parent=1 // pred_fallthru
      _
    // Predicated region
    $region26: #{tpu_custom_call.1} parent=1 // pred_check
      _
    $region27: #{tpu_custom_call.1} parent=1 // pred_check_branch
      %57 = sbr.rel (0) target = $region29
    $region28: #{tpu_custom_call.1} parent=1 // pred_region
      %58 = dma.done [#allocation6], 16384
    $region29: #{tpu_custom_call.1} parent=1 // pred_fallthru
      _
    // Predicated region
    $region30: #{tpu_custom_call.1} parent=1 // pred_check
      _
    $region31: #{tpu_custom_call.1} parent=1 // pred_check_branch
      %60 = sbr.rel (0) target = $region33
    $region32: #{tpu_custom_call.1} parent=1 // pred_region
      %61 = dma.done [#allocation6], 2048
    $region33: #{tpu_custom_call.1} parent=1 // pred_fallthru
      _
    %v62 = vld [vmem:[#allocation2] sm:$0xff]
    %v63 = vld [vmem:[#allocation2 + $0x8] sm:$0xff]
    %v64 = vld [vmem:[#allocation2 + $0x10] sm:$0xff]
    %v65 = vld [vmem:[#allocation2 + $0x18] sm:$0xff]
    %v66 = vld [vmem:[#allocation2 + $0x20] sm:$0xff]
    %v67 = vld [vmem:[#allocation2 + $0x28] sm:$0xff]
    %v68 = vld [vmem:[#allocation2 + $0x30] sm:$0xff]
    %v69 = vld [vmem:[#allocation2 + $0x38] sm:$0xff]
    %v70 = vld [vmem:[#allocation5] sm:$0xff]
    %v71 = vld [vmem:[#allocation5 + $0x8] sm:$0xff]
    %v72 = vld [vmem:[#allocation5 + $0x10] sm:$0xff]
    %v73 = vld [vmem:[#allocation5 + $0x18] sm:$0xff]
    %v74 = vld [vmem:[#allocation5 + $0x20] sm:$0xff]
    %v75 = vld [vmem:[#allocation5 + $0x28] sm:$0xff]
    %v76 = vld [vmem:[#allocation5 + $0x30] sm:$0xff]
    %v77 = vld [vmem:[#allocation5 + $0x38] sm:$0xff]
    %v78 = vld [vmem:[#allocation5 + $0x40] sm:$0xff]
    %v79 = vld [vmem:[#allocation5 + $0x48] sm:$0xff]
    %v80 = vld [vmem:[#allocation5 + $0x50] sm:$0xff]
    %v81 = vld [vmem:[#allocation5 + $0x58] sm:$0xff]
    %v82 = vld [vmem:[#allocation5 + $0x60] sm:$0xff]
    %v83 = vld [vmem:[#allocation5 + $0x68] sm:$0xff]
    %v84 = vld [vmem:[#allocation5 + $0x70] sm:$0xff]
    %v85 = vld [vmem:[#allocation5 + $0x78] sm:$0xff]
    %v86 = vld [vmem:[#allocation5 + $0x80] sm:$0xff]
    %v87 = vld [vmem:[#allocation5 + $0x88] sm:$0xff]
    %v88 = vld [vmem:[#allocation5 + $0x90] sm:$0xff]
    %v89 = vld [vmem:[#allocation5 + $0x98] sm:$0xff]
    %v90 = vld [vmem:[#allocation5 + $0xa0] sm:$0xff]
    %v91 = vld [vmem:[#allocation5 + $0xa8] sm:$0xff]
    %v92 = vld [vmem:[#allocation5 + $0xb0] sm:$0xff]
    %v93 = vld [vmem:[#allocation5 + $0xb8] sm:$0xff]
    %v94 = vld [vmem:[#allocation5 + $0xc0] sm:$0xff]
    %v95 = vld [vmem:[#allocation5 + $0xc8] sm:$0xff]
    %v96 = vld [vmem:[#allocation5 + $0xd0] sm:$0xff]
    %v97 = vld [vmem:[#allocation5 + $0xd8] sm:$0xff]
    %v98 = vld [vmem:[#allocation5 + $0xe0] sm:$0xff]
    %v99 = vld [vmem:[#allocation5 + $0xe8] sm:$0xff]
    %v100 = vld [vmem:[#allocation5 + $0xf0] sm:$0xff]
    %v101 = vld [vmem:[#allocation5 + $0xf8] sm:$0xff]
    %v102 = vld [vmem:[#allocation5 + $0x100] sm:$0xff]
    %v103 = vld [vmem:[#allocation5 + $0x108] sm:$0xff]
    %v104 = vld [vmem:[#allocation5 + $0x110] sm:$0xff]
    %v105 = vld [vmem:[#allocation5 + $0x118] sm:$0xff]
    %v106 = vld [vmem:[#allocation5 + $0x120] sm:$0xff]
    %v107 = vld [vmem:[#allocation5 + $0x128] sm:$0xff]
    %v108 = vld [vmem:[#allocation5 + $0x130] sm:$0xff]
    %v109 = vld [vmem:[#allocation5 + $0x138] sm:$0xff]
    %v110 = vld [vmem:[#allocation5 + $0x140] sm:$0xff]
    %v111 = vld [vmem:[#allocation5 + $0x148] sm:$0xff]
    %v112 = vld [vmem:[#allocation5 + $0x150] sm:$0xff]
    %v113 = vld [vmem:[#allocation5 + $0x158] sm:$0xff]
    %v114 = vld [vmem:[#allocation5 + $0x160] sm:$0xff]
    %v115 = vld [vmem:[#allocation5 + $0x168] sm:$0xff]
    %v116 = vld [vmem:[#allocation5 + $0x170] sm:$0xff]
    %v117 = vld [vmem:[#allocation5 + $0x178] sm:$0xff]
    %v118 = vld [vmem:[#allocation5 + $0x180] sm:$0xff]
    %v119 = vld [vmem:[#allocation5 + $0x188] sm:$0xff]
    %v120 = vld [vmem:[#allocation5 + $0x190] sm:$0xff]
    %v121 = vld [vmem:[#allocation5 + $0x198] sm:$0xff]
    %v122 = vld [vmem:[#allocation5 + $0x1a0] sm:$0xff]
    %v123 = vld [vmem:[#allocation5 + $0x1a8] sm:$0xff]
    %v124 = vld [vmem:[#allocation5 + $0x1b0] sm:$0xff]
    %v125 = vld [vmem:[#allocation5 + $0x1b8] sm:$0xff]
    %v126 = vld [vmem:[#allocation5 + $0x1c0] sm:$0xff]
    %v127 = vld [vmem:[#allocation5 + $0x1c8] sm:$0xff]
    %v128 = vld [vmem:[#allocation5 + $0x1d0] sm:$0xff]
    %v129 = vld [vmem:[#allocation5 + $0x1d8] sm:$0xff]
    %v130 = vld [vmem:[#allocation5 + $0x1e0] sm:$0xff]
    %v131 = vld [vmem:[#allocation5 + $0x1e8] sm:$0xff]
    %v132 = vld [vmem:[#allocation5 + $0x1f0] sm:$0xff]
    %v133 = vld [vmem:[#allocation5 + $0x1f8] sm:$0xff]
    %v134 = vld [vmem:[#allocation5 + $0x200] sm:$0xff]
    %v135 = vld [vmem:[#allocation5 + $0x208] sm:$0xff]
    %v136 = vld [vmem:[#allocation5 + $0x210] sm:$0xff]
    %v137 = vld [vmem:[#allocation5 + $0x218] sm:$0xff]
    %v138 = vld [vmem:[#allocation5 + $0x220] sm:$0xff]
    %v139 = vld [vmem:[#allocation5 + $0x228] sm:$0xff]
    %v140 = vld [vmem:[#allocation5 + $0x230] sm:$0xff]
    %v141 = vld [vmem:[#allocation5 + $0x238] sm:$0xff]
    %v142 = vld [vmem:[#allocation5 + $0x240] sm:$0xff]
    %v143 = vld [vmem:[#allocation5 + $0x248] sm:$0xff]
    %v144 = vld [vmem:[#allocation5 + $0x250] sm:$0xff]
    %v145 = vld [vmem:[#allocation5 + $0x258] sm:$0xff]
    %v146 = vld [vmem:[#allocation5 + $0x260] sm:$0xff]
    %v147 = vld [vmem:[#allocation5 + $0x268] sm:$0xff]
    %v148 = vld [vmem:[#allocation5 + $0x270] sm:$0xff]
    %v149 = vld [vmem:[#allocation5 + $0x278] sm:$0xff]
    %v150 = vld [vmem:[#allocation5 + $0x280] sm:$0xff]
    %v151 = vld [vmem:[#allocation5 + $0x288] sm:$0xff]
    %v152 = vld [vmem:[#allocation5 + $0x290] sm:$0xff]
    %v153 = vld [vmem:[#allocation5 + $0x298] sm:$0xff]
    %v154 = vld [vmem:[#allocation5 + $0x2a0] sm:$0xff]
    %v155 = vld [vmem:[#allocation5 + $0x2a8] sm:$0xff]
    %v156 = vld [vmem:[#allocation5 + $0x2b0] sm:$0xff]
    %v157 = vld [vmem:[#allocation5 + $0x2b8] sm:$0xff]
    %v158 = vld [vmem:[#allocation5 + $0x2c0] sm:$0xff]
    %v159 = vld [vmem:[#allocation5 + $0x2c8] sm:$0xff]
    %v160 = vld [vmem:[#allocation5 + $0x2d0] sm:$0xff]
    %v161 = vld [vmem:[#allocation5 + $0x2d8] sm:$0xff]
    %v162 = vld [vmem:[#allocation5 + $0x2e0] sm:$0xff]
    %v163 = vld [vmem:[#allocation5 + $0x2e8] sm:$0xff]
    %v164 = vld [vmem:[#allocation5 + $0x2f0] sm:$0xff]
    %v165 = vld [vmem:[#allocation5 + $0x2f8] sm:$0xff]
    %v166 = vld [vmem:[#allocation5 + $0x300] sm:$0xff]
    %v167 = vld [vmem:[#allocation5 + $0x308] sm:$0xff]
    %v168 = vld [vmem:[#allocation5 + $0x310] sm:$0xff]
    %v169 = vld [vmem:[#allocation5 + $0x318] sm:$0xff]
    %v170 = vld [vmem:[#allocation5 + $0x320] sm:$0xff]
    %v171 = vld [vmem:[#allocation5 + $0x328] sm:$0xff]
    %v172 = vld [vmem:[#allocation5 + $0x330] sm:$0xff]
    %v173 = vld [vmem:[#allocation5 + $0x338] sm:$0xff]
    %v174 = vld [vmem:[#allocation5 + $0x340] sm:$0xff]
    %v175 = vld [vmem:[#allocation5 + $0x348] sm:$0xff]
    %v176 = vld [vmem:[#allocation5 + $0x350] sm:$0xff]
    %v177 = vld [vmem:[#allocation5 + $0x358] sm:$0xff]
    %v178 = vld [vmem:[#allocation5 + $0x360] sm:$0xff]
    %v179 = vld [vmem:[#allocation5 + $0x368] sm:$0xff]
    %v180 = vld [vmem:[#allocation5 + $0x370] sm:$0xff]
    %v181 = vld [vmem:[#allocation5 + $0x378] sm:$0xff]
    %v182 = vld [vmem:[#allocation5 + $0x380] sm:$0xff]
    %v183 = vld [vmem:[#allocation5 + $0x388] sm:$0xff]
    %v184 = vld [vmem:[#allocation5 + $0x390] sm:$0xff]
    %v185 = vld [vmem:[#allocation5 + $0x398] sm:$0xff]
    %v186 = vld [vmem:[#allocation5 + $0x3a0] sm:$0xff]
    %v187 = vld [vmem:[#allocation5 + $0x3a8] sm:$0xff]
    %v188 = vld [vmem:[#allocation5 + $0x3b0] sm:$0xff]
    %v189 = vld [vmem:[#allocation5 + $0x3b8] sm:$0xff]
    %v190 = vld [vmem:[#allocation5 + $0x3c0] sm:$0xff]
    %v191 = vld [vmem:[#allocation5 + $0x3c8] sm:$0xff]
    %v192 = vld [vmem:[#allocation5 + $0x3d0] sm:$0xff]
    %v193 = vld [vmem:[#allocation5 + $0x3d8] sm:$0xff]
    %v194 = vld [vmem:[#allocation5 + $0x3e0] sm:$0xff]
    %v195 = vld [vmem:[#allocation5 + $0x3e8] sm:$0xff]
    %v196 = vld [vmem:[#allocation5 + $0x3f0] sm:$0xff]
    %v197 = vld [vmem:[#allocation5 + $0x3f8] sm:$0xff]
    %v198 = vld [vmem:[%s2] sm:$0x1]
    %v200 = vlaneseq
    %v201 = vshrl.u32 %v200, 7
    %v202 = vsub.s32 0, %v201
    %v203 = vrot.slane %v198, %v202
    %v213 = vcombine.low %v62, %v64
    %v214 = vcombine.high %v62, %v64
    %v215 = vcombine.low %v66, %v68
    %v216 = vcombine.high %v66, %v68
    %v218 = vunpack.c.l.s4 1983009808
    %v219 = vunpack.c.0.s8 %v218
    %v220 = vlaneseq
    %v221 = vshrl.u32 %v220, 7
    %v222 = vsub.s32 %v219, %v221
    %v223 = vrot.slane %v213, %v222
    %v225 = vunpack.c.l.s4 1983009808
    %v226 = vunpack.c.0.s8 %v225
    %v227 = vlaneseq
    %v228 = vshrl.u32 %v227, 7
    %v229 = vsub.s32 %v226, %v228
    %v230 = vrot.slane %v214, %v229
    %v232 = vunpack.c.l.s4 1983009808
    %v233 = vunpack.c.0.s8 %v232
    %v234 = vlaneseq
    %v235 = vshrl.u32 %v234, 7
    %v236 = vsub.s32 %v233, %v235
    %v237 = vrot.slane %v215, %v236
    %v239 = vunpack.c.l.s4 1983009808
    %v240 = vunpack.c.0.s8 %v239
    %v241 = vlaneseq
    %v242 = vshrl.u32 %v241, 7
    %v243 = vsub.s32 %v240, %v242
    %v244 = vrot.slane %v216, %v243
    %v245 = vcombine.low %v223, %v237
    %v246 = vcombine.high %v223, %v237
    %v247 = vcombine.low %v230, %v244
    %v248 = vcombine.high %v230, %v244
    %v249 = vcombine.low %v63, %v65
    %v250 = vcombine.high %v63, %v65
    %v251 = vcombine.low %v67, %v69
    %v252 = vcombine.high %v67, %v69
    %v254 = vunpack.c.l.s4 1983009808
    %v255 = vunpack.c.0.s8 %v254
    %v256 = vlaneseq
    %v257 = vshrl.u32 %v256, 7
    %v258 = vsub.s32 %v255, %v257
    %v259 = vrot.slane %v249, %v258
    %v261 = vunpack.c.l.s4 1983009808
    %v262 = vunpack.c.0.s8 %v261
    %v263 = vlaneseq
    %v264 = vshrl.u32 %v263, 7
    %v265 = vsub.s32 %v262, %v264
    %v266 = vrot.slane %v250, %v265
    %v268 = vunpack.c.l.s4 1983009808
    %v269 = vunpack.c.0.s8 %v268
    %v270 = vlaneseq
    %v271 = vshrl.u32 %v270, 7
    %v272 = vsub.s32 %v269, %v271
    %v273 = vrot.slane %v251, %v272
    %v275 = vunpack.c.l.s4 1983009808
    %v276 = vunpack.c.0.s8 %v275
    %v277 = vlaneseq
    %v278 = vshrl.u32 %v277, 7
    %v279 = vsub.s32 %v276, %v278
    %v280 = vrot.slane %v252, %v279
    %v281 = vcombine.low %v259, %v273
    %v282 = vcombine.high %v259, %v273
    %v283 = vcombine.low %v266, %v280
    %v284 = vcombine.high %v266, %v280
    %293 = vmatprep.subr.mxu0 0.0
    %294 = vmatpush1.msra.mxu0 %v70
    %295 = vmatprep.subr.mxu0 0.0
    %296 = vmatpush1.msra.mxu0 %v71
    %297 = vmatprep.subr.mxu0 0.0
    %298 = vmatpush1.msra.mxu0 %v72
    %299 = vmatprep.subr.mxu0 0.0
    %300 = vmatpush1.msra.mxu0 %v73
    %301 = vmatprep.subr.mxu0 0.0
    %302 = vmatpush1.msra.mxu0 %v74
    %303 = vmatprep.subr.mxu0 0.0
    %304 = vmatpush1.msra.mxu0 %v75
    %305 = vmatprep.subr.mxu0 0.0
    %306 = vmatpush1.msra.mxu0 %v76
    %307 = vmatprep.subr.mxu0 0.0
    %308 = vmatpush1.msra.mxu0 %v77
    %309 = vmatprep.subr.mxu0 0.0
    %310 = vmatpush1.msra.mxu0 %v78
    %311 = vmatprep.subr.mxu0 0.0
    %312 = vmatpush1.msra.mxu0 %v79
    %313 = vmatprep.subr.mxu0 0.0
    %314 = vmatpush1.msra.mxu0 %v80
    %315 = vmatprep.subr.mxu0 0.0
    %316 = vmatpush1.msra.mxu0 %v81
    %317 = vmatprep.subr.mxu0 0.0
    %318 = vmatpush1.msra.mxu0 %v82
    %319 = vmatprep.subr.mxu0 0.0
    %320 = vmatpush1.msra.mxu0 %v83
    %321 = vmatprep.subr.mxu0 0.0
    %322 = vmatpush1.msra.mxu0 %v84
    %323 = vmatprep.subr.mxu0 0.0
    %324 = vmatpush1.msra.mxu0 %v85
    %325 = vmatprep.subr.mxu0 0.0
    %326 = vmatpush1.msra.mxu0 %v86
    %327 = vmatprep.subr.mxu0 0.0
    %328 = vmatpush1.msra.mxu0 %v87
    %329 = vmatprep.subr.mxu0 0.0
    %330 = vmatpush1.msra.mxu0 %v88
    %331 = vmatprep.subr.mxu0 0.0
    %332 = vmatpush1.msra.mxu0 %v89
    %333 = vmatprep.subr.mxu0 0.0
    %334 = vmatpush1.msra.mxu0 %v90
    %335 = vmatprep.subr.mxu0 0.0
    %336 = vmatpush1.msra.mxu0 %v91
    %337 = vmatprep.subr.mxu0 0.0
    %338 = vmatpush1.msra.mxu0 %v92
    %339 = vmatprep.subr.mxu0 0.0
    %340 = vmatpush1.msra.mxu0 %v93
    %341 = vmatprep.subr.mxu0 0.0
    %342 = vmatpush1.msra.mxu0 %v94
    %343 = vmatprep.subr.mxu0 0.0
    %344 = vmatpush1.msra.mxu0 %v95
    %345 = vmatprep.subr.mxu0 0.0
    %346 = vmatpush1.msra.mxu0 %v96
    %347 = vmatprep.subr.mxu0 0.0
    %348 = vmatpush1.msra.mxu0 %v97
    %349 = vmatprep.subr.mxu0 0.0
    %350 = vmatpush1.msra.mxu0 %v98
    %351 = vmatprep.subr.mxu0 0.0
    %352 = vmatpush1.msra.mxu0 %v99
    %353 = vmatprep.subr.mxu0 0.0
    %354 = vmatpush1.msra.mxu0 %v100
    %355 = vmatprep.subr.mxu0 0.0
    %356 = vmatpush1.msra.mxu0 %v101
    %357 = vmatprep.mubr.f32.mxu0 %v246
    %358 = vmatmul.mubr.f32.gmra.mrb[0].mxu0 %v245
    %v359 = vpop.f32.mrb[0].mxu0
    %v360 = vadd.f32 %v203, %v359
    %v361 = vpop.f32.mrb[0].mxu0
    %362 = vdwg.mxu0
    %363 = vmatprep.subr.mxu0 0.0
    %364 = vmatpush1.msra.mxu0 %v102
    %365 = vmatprep.subr.mxu0 0.0
    %366 = vmatpush1.msra.mxu0 %v103
    %367 = vmatprep.subr.mxu0 0.0
    %368 = vmatpush1.msra.mxu0 %v104
    %369 = vmatprep.subr.mxu0 0.0
    %370 = vmatpush1.msra.mxu0 %v105
    %371 = vmatprep.subr.mxu0 0.0
    %372 = vmatpush1.msra.mxu0 %v106
    %373 = vmatprep.subr.mxu0 0.0
    %374 = vmatpush1.msra.mxu0 %v107
    %375 = vmatprep.subr.mxu0 0.0
    %376 = vmatpush1.msra.mxu0 %v108
    %377 = vmatprep.subr.mxu0 0.0
    %378 = vmatpush1.msra.mxu0 %v109
    %379 = vmatprep.subr.mxu0 0.0
    %380 = vmatpush1.msra.mxu0 %v110
    %381 = vmatprep.subr.mxu0 0.0
    %382 = vmatpush1.msra.mxu0 %v111
    %383 = vmatprep.subr.mxu0 0.0
    %384 = vmatpush1.msra.mxu0 %v112
    %385 = vmatprep.subr.mxu0 0.0
    %386 = vmatpush1.msra.mxu0 %v113
    %387 = vmatprep.subr.mxu0 0.0
    %388 = vmatpush1.msra.mxu0 %v114
    %389 = vmatprep.subr.mxu0 0.0
    %390 = vmatpush1.msra.mxu0 %v115
    %391 = vmatprep.subr.mxu0 0.0
    %392 = vmatpush1.msra.mxu0 %v116
    %393 = vmatprep.subr.mxu0 0.0
    %394 = vmatpush1.msra.mxu0 %v117
    %395 = vmatprep.subr.mxu0 0.0
    %396 = vmatpush1.msra.mxu0 %v118
    %397 = vmatprep.subr.mxu0 0.0
    %398 = vmatpush1.msra.mxu0 %v119
    %399 = vmatprep.subr.mxu0 0.0
    %400 = vmatpush1.msra.mxu0 %v120
    %401 = vmatprep.subr.mxu0 0.0
    %402 = vmatpush1.msra.mxu0 %v121
    %403 = vmatprep.subr.mxu0 0.0
    %404 = vmatpush1.msra.mxu0 %v122
    %405 = vmatprep.subr.mxu0 0.0
    %406 = vmatpush1.msra.mxu0 %v123
    %407 = vmatprep.subr.mxu0 0.0
    %408 = vmatpush1.msra.mxu0 %v124
    %409 = vmatprep.subr.mxu0 0.0
    %410 = vmatpush1.msra.mxu0 %v125
    %411 = vmatprep.subr.mxu0 0.0
    %412 = vmatpush1.msra.mxu0 %v126
    %413 = vmatprep.subr.mxu0 0.0
    %414 = vmatpush1.msra.mxu0 %v127
    %415 = vmatprep.subr.mxu0 0.0
    %416 = vmatpush1.msra.mxu0 %v128
    %417 = vmatprep.subr.mxu0 0.0
    %418 = vmatpush1.msra.mxu0 %v129
    %419 = vmatprep.subr.mxu0 0.0
    %420 = vmatpush1.msra.mxu0 %v130
    %421 = vmatprep.subr.mxu0 0.0
    %422 = vmatpush1.msra.mxu0 %v131
    %423 = vmatprep.subr.mxu0 0.0
    %424 = vmatpush1.msra.mxu0 %v132
    %425 = vmatprep.subr.mxu0 0.0
    %426 = vmatpush1.msra.mxu0 %v133
    %427 = vmatprep.mubr.f32.mxu0 %v248
    %428 = vmatmul.mubr.f32.gmra.mrb[0].mxu0 %v247
    %v429 = vpop.f32.mrb[0].mxu0
    %v430 = vadd.f32 %v360, %v429
    %v431 = vpop.f32.mrb[0].mxu0
    %432 = vdwg.mxu0
    %433 = vmatprep.subr.mxu0 0.0
    %434 = vmatpush1.msra.mxu0 %v134
    %435 = vmatprep.subr.mxu0 0.0
    %436 = vmatpush1.msra.mxu0 %v135
    %437 = vmatprep.subr.mxu0 0.0
    %438 = vmatpush1.msra.mxu0 %v136
    %439 = vmatprep.subr.mxu0 0.0
    %440 = vmatpush1.msra.mxu0 %v137
    %441 = vmatprep.subr.mxu0 0.0
    %442 = vmatpush1.msra.mxu0 %v138
    %443 = vmatprep.subr.mxu0 0.0
    %444 = vmatpush1.msra.mxu0 %v139
    %445 = vmatprep.subr.mxu0 0.0
    %446 = vmatpush1.msra.mxu0 %v140
    %447 = vmatprep.subr.mxu0 0.0
    %448 = vmatpush1.msra.mxu0 %v141
    %449 = vmatprep.subr.mxu0 0.0
    %450 = vmatpush1.msra.mxu0 %v142
    %451 = vmatprep.subr.mxu0 0.0
    %452 = vmatpush1.msra.mxu0 %v143
    %453 = vmatprep.subr.mxu0 0.0
    %454 = vmatpush1.msra.mxu0 %v144
    %455 = vmatprep.subr.mxu0 0.0
    %456 = vmatpush1.msra.mxu0 %v145
    %457 = vmatprep.subr.mxu0 0.0
    %458 = vmatpush1.msra.mxu0 %v146
    %459 = vmatprep.subr.mxu0 0.0
    %460 = vmatpush1.msra.mxu0 %v147
    %461 = vmatprep.subr.mxu0 0.0
    %462 = vmatpush1.msra.mxu0 %v148
    %463 = vmatprep.subr.mxu0 0.0
    %464 = vmatpush1.msra.mxu0 %v149
    %465 = vmatprep.subr.mxu0 0.0
    %466 = vmatpush1.msra.mxu0 %v150
    %467 = vmatprep.subr.mxu0 0.0
    %468 = vmatpush1.msra.mxu0 %v151
    %469 = vmatprep.subr.mxu0 0.0
    %470 = vmatpush1.msra.mxu0 %v152
    %471 = vmatprep.subr.mxu0 0.0
    %472 = vmatpush1.msra.mxu0 %v153
    %473 = vmatprep.subr.mxu0 0.0
    %474 = vmatpush1.msra.mxu0 %v154
    %475 = vmatprep.subr.mxu0 0.0
    %476 = vmatpush1.msra.mxu0 %v155
    %477 = vmatprep.subr.mxu0 0.0
    %478 = vmatpush1.msra.mxu0 %v156
    %479 = vmatprep.subr.mxu0 0.0
    %480 = vmatpush1.msra.mxu0 %v157
    %481 = vmatprep.subr.mxu0 0.0
    %482 = vmatpush1.msra.mxu0 %v158
    %483 = vmatprep.subr.mxu0 0.0
    %484 = vmatpush1.msra.mxu0 %v159
    %485 = vmatprep.subr.mxu0 0.0
    %486 = vmatpush1.msra.mxu0 %v160
    %487 = vmatprep.subr.mxu0 0.0
    %488 = vmatpush1.msra.mxu0 %v161
    %489 = vmatprep.subr.mxu0 0.0
    %490 = vmatpush1.msra.mxu0 %v162
    %491 = vmatprep.subr.mxu0 0.0
    %492 = vmatpush1.msra.mxu0 %v163
    %493 = vmatprep.subr.mxu0 0.0
    %494 = vmatpush1.msra.mxu0 %v164
    %495 = vmatprep.subr.mxu0 0.0
    %496 = vmatpush1.msra.mxu0 %v165
    %497 = vmatprep.mubr.f32.mxu0 %v282
    %498 = vmatmul.mubr.f32.gmra.mrb[0].mxu0 %v281
    %v499 = vpop.f32.mrb[0].mxu0
    %v500 = vadd.f32 %v430, %v499
    %v501 = vpop.f32.mrb[0].mxu0
    %502 = vdwg.mxu0
    %503 = vmatprep.subr.mxu0 0.0
    %504 = vmatpush1.msra.mxu0 %v166
    %505 = vmatprep.subr.mxu0 0.0
    %506 = vmatpush1.msra.mxu0 %v167
    %507 = vmatprep.subr.mxu0 0.0
    %508 = vmatpush1.msra.mxu0 %v168
    %509 = vmatprep.subr.mxu0 0.0
    %510 = vmatpush1.msra.mxu0 %v169
    %511 = vmatprep.subr.mxu0 0.0
    %512 = vmatpush1.msra.mxu0 %v170
    %513 = vmatprep.subr.mxu0 0.0
    %514 = vmatpush1.msra.mxu0 %v171
    %515 = vmatprep.subr.mxu0 0.0
    %516 = vmatpush1.msra.mxu0 %v172
    %517 = vmatprep.subr.mxu0 0.0
    %518 = vmatpush1.msra.mxu0 %v173
    %519 = vmatprep.subr.mxu0 0.0
    %520 = vmatpush1.msra.mxu0 %v174
    %521 = vmatprep.subr.mxu0 0.0
    %522 = vmatpush1.msra.mxu0 %v175
    %523 = vmatprep.subr.mxu0 0.0
    %524 = vmatpush1.msra.mxu0 %v176
    %525 = vmatprep.subr.mxu0 0.0
    %526 = vmatpush1.msra.mxu0 %v177
    %527 = vmatprep.subr.mxu0 0.0
    %528 = vmatpush1.msra.mxu0 %v178
    %529 = vmatprep.subr.mxu0 0.0
    %530 = vmatpush1.msra.mxu0 %v179
    %531 = vmatprep.subr.mxu0 0.0
    %532 = vmatpush1.msra.mxu0 %v180
    %533 = vmatprep.subr.mxu0 0.0
    %534 = vmatpush1.msra.mxu0 %v181
    %535 = vmatprep.subr.mxu0 0.0
    %536 = vmatpush1.msra.mxu0 %v182
    %537 = vmatprep.subr.mxu0 0.0
    %538 = vmatpush1.msra.mxu0 %v183
    %539 = vmatprep.subr.mxu0 0.0
    %540 = vmatpush1.msra.mxu0 %v184
    %541 = vmatprep.subr.mxu0 0.0
    %542 = vmatpush1.msra.mxu0 %v185
    %543 = vmatprep.subr.mxu0 0.0
    %544 = vmatpush1.msra.mxu0 %v186
    %545 = vmatprep.subr.mxu0 0.0
    %546 = vmatpush1.msra.mxu0 %v187
    %547 = vmatprep.subr.mxu0 0.0
    %548 = vmatpush1.msra.mxu0 %v188
    %549 = vmatprep.subr.mxu0 0.0
    %550 = vmatpush1.msra.mxu0 %v189
    %551 = vmatprep.subr.mxu0 0.0
    %552 = vmatpush1.msra.mxu0 %v190
    %553 = vmatprep.subr.mxu0 0.0
    %554 = vmatpush1.msra.mxu0 %v191
    %555 = vmatprep.subr.mxu0 0.0
    %556 = vmatpush1.msra.mxu0 %v192
    %557 = vmatprep.subr.mxu0 0.0
    %558 = vmatpush1.msra.mxu0 %v193
    %559 = vmatprep.subr.mxu0 0.0
    %560 = vmatpush1.msra.mxu0 %v194
    %561 = vmatprep.subr.mxu0 0.0
    %562 = vmatpush1.msra.mxu0 %v195
    %563 = vmatprep.subr.mxu0 0.0
    %564 = vmatpush1.msra.mxu0 %v196
    %565 = vmatprep.subr.mxu0 0.0
    %566 = vmatpush1.msra.mxu0 %v197
    %567 = vmatprep.mubr.f32.mxu0 %v284
    %568 = vmatmul.mubr.f32.gmra.mrb[0].mxu0 %v283
    %v569 = vpop.f32.mrb[0].mxu0
    %v570 = vadd.f32 %v500, %v569
    %v571 = vpop.f32.mrb[0].mxu0
    %572 = vdwg.mxu0
    %v573 = vmax.f32 %v570, 0.0
    %v574 = vld [vmem:[#allocation7] sm:$0xff]
    %v575 = vld [vmem:[#allocation7 + $0x8] sm:$0xff]
    %v576 = vld [vmem:[#allocation7 + $0x10] sm:$0xff]
    %v577 = vld [vmem:[#allocation7 + $0x18] sm:$0xff]
    %v578 = vld [vmem:[#allocation7 + $0x20] sm:$0xff]
    %v579 = vld [vmem:[#allocation7 + $0x28] sm:$0xff]
    %v580 = vld [vmem:[#allocation7 + $0x30] sm:$0xff]
    %v581 = vld [vmem:[#allocation7 + $0x38] sm:$0xff]
    %v582 = vld [vmem:[#allocation7 + $0x40] sm:$0xff]
    %v583 = vld [vmem:[#allocation7 + $0x48] sm:$0xff]
    %v584 = vld [vmem:[#allocation7 + $0x50] sm:$0xff]
    %v585 = vld [vmem:[#allocation7 + $0x58] sm:$0xff]
    %v586 = vld [vmem:[#allocation7 + $0x60] sm:$0xff]
    %v587 = vld [vmem:[#allocation7 + $0x68] sm:$0xff]
    %v588 = vld [vmem:[#allocation7 + $0x70] sm:$0xff]
    %v589 = vld [vmem:[#allocation7 + $0x78] sm:$0xff]
    %v590 = vld [vmem:[%s4] sm:$0x1]
    %v592 = vlaneseq
    %v593 = vshrl.u32 %v592, 7
    %v594 = vsub.s32 0, %v593
    %v595 = vrot.slane %v590, %v594
    %597 = vmatprep.subr.mxu0 0.0
    %598 = vmatpush1.msra.mxu0 %v574
    %599 = vmatprep.subr.mxu0 0.0
    %600 = vmatpush1.msra.mxu0 %v575
    %601 = vmatprep.subr.mxu0 0.0
    %602 = vmatpush1.msra.mxu0 %v576
    %603 = vmatprep.subr.mxu0 0.0
    %604 = vmatpush1.msra.mxu0 %v577
    %605 = vmatprep.subr.mxu0 0.0
    %606 = vmatpush1.msra.mxu0 %v578
    %607 = vmatprep.subr.mxu0 0.0
    %608 = vmatpush1.msra.mxu0 %v579
    %609 = vmatprep.subr.mxu0 0.0
    %610 = vmatpush1.msra.mxu0 %v580
    %611 = vmatprep.subr.mxu0 0.0
    %612 = vmatpush1.msra.mxu0 %v581
    %613 = vmatprep.subr.mxu0 0.0
    %614 = vmatpush1.msra.mxu0 %v582
    %615 = vmatprep.subr.mxu0 0.0
    %616 = vmatpush1.msra.mxu0 %v583
    %617 = vmatprep.subr.mxu0 0.0
    %618 = vmatpush1.msra.mxu0 %v584
    %619 = vmatprep.subr.mxu0 0.0
    %620 = vmatpush1.msra.mxu0 %v585
    %621 = vmatprep.subr.mxu0 0.0
    %622 = vmatpush1.msra.mxu0 %v586
    %623 = vmatprep.subr.mxu0 0.0
    %624 = vmatpush1.msra.mxu0 %v587
    %625 = vmatprep.subr.mxu0 0.0
    %626 = vmatpush1.msra.mxu0 %v588
    %627 = vmatprep.subr.mxu0 0.0
    %628 = vmatpush1.msra.mxu0 %v589
    %629 = vmatprep.subr.mxu0 0.0
    %630 = vmatpush1.msra.mxu0 0.0
    %631 = vmatprep.subr.mxu0 0.0
    %632 = vmatpush1.msra.mxu0 0.0
    %633 = vmatprep.subr.mxu0 0.0
    %634 = vmatpush1.msra.mxu0 0.0
    %635 = vmatprep.subr.mxu0 0.0
    %636 = vmatpush1.msra.mxu0 0.0
    %637 = vmatprep.subr.mxu0 0.0
    %638 = vmatpush1.msra.mxu0 0.0
    %639 = vmatprep.subr.mxu0 0.0
    %640 = vmatpush1.msra.mxu0 0.0
    %641 = vmatprep.subr.mxu0 0.0
    %642 = vmatpush1.msra.mxu0 0.0
    %643 = vmatprep.subr.mxu0 0.0
    %644 = vmatpush1.msra.mxu0 0.0
    %645 = vmatprep.subr.mxu0 0.0
    %646 = vmatpush1.msra.mxu0 0.0
    %647 = vmatprep.subr.mxu0 0.0
    %648 = vmatpush1.msra.mxu0 0.0
    %649 = vmatprep.subr.mxu0 0.0
    %650 = vmatpush1.msra.mxu0 0.0
    %651 = vmatprep.subr.mxu0 0.0
    %652 = vmatpush1.msra.mxu0 0.0
    %653 = vmatprep.subr.mxu0 0.0
    %654 = vmatpush1.msra.mxu0 0.0
    %655 = vmatprep.subr.mxu0 0.0
    %656 = vmatpush1.msra.mxu0 0.0
    %657 = vmatprep.subr.mxu0 0.0
    %658 = vmatpush1.msra.mxu0 0.0
    %659 = vmatprep.subr.mxu0 0.0
    %660 = vmatpush1.msra.mxu0 0.0
    %661 = vmatprep.mubr.f32.mxu0 0.0
    %662 = vmatmul.mubr.f32.gmra.mrb[0].mxu0 %v573
    %v663 = vpop.f32.mrb[0].mxu0
    %v664 = vadd.f32 %v595, %v663
    %v665 = vpop.f32.mrb[0].mxu0
    %666 = vdwg.mxu0
    %667 = vst [vmem:[#allocation8] sm:$0xff] %v664
    // Predicated region
    $region34: #{tpu_custom_call.1} parent=1 // pred_check
      _
    $region35: #{tpu_custom_call.1} parent=1 // pred_check_branch
      %669 = sbr.rel (0) target = $region37
    $region36: #{tpu_custom_call.1} parent=1 // pred_region
      %s671 = ssub.s32 128, 32
      %672 = vsyncadd [#allocation4], %s671
      %s673 = sshll.u32 [#allocation8], 4
      %s674 = int_to_ptr.vmem [resolvable:$true] %s673
      %679 = dma.vmem_to_hbm [thread:$0]  %s674, 32, %s5, [#allocation4], 32, 32, 2
    $region37: #{tpu_custom_call.1} parent=1 // pred_fallthru
      _
    // Predicated region
    $region38: #{tpu_custom_call.1} parent=1 // pred_check
      _
    $region39: #{tpu_custom_call.1} parent=1 // pred_check_branch
      %681 = sbr.rel (0) target = $region41
    $region40: #{tpu_custom_call.1} parent=1 // pred_region
      %682 = dma.done [#allocation4], 128
    $region41: #{tpu_custom_call.1} parent=1 // pred_fallthru
      _
    %683 = vsyncpa [#allocation3], 1
    %684 = vsyncpa [#allocation6], 1
    %685 = vsyncpa [#allocation4], 1

</llo_original>
